<compile_context>
chip_gen: v5e
topology: v5e:2x2
jax: 0.10.0
libtpu: 0.0.40
codegen_flags: <defaults>
</compile_context>

<pallas_src>
import functools

import jax
import jax.numpy as jnp
from jax.experimental import pallas as pl
from jax.experimental.pallas import tpu as pltpu


def _double_conv_kernel(x_ref, bw1_ref, sh1_ref, bw2_ref, sh2_ref, out_ref,
                        xp_s, y1p_s, *, Nb, H, W, Cin, Cout):
    """Fused (conv3x3 -> BN -> ReLU) x 2 for Nb batch elements per grid step.

    x_ref   : (Nb, H, W*Cin)        bf16  lane-packed input slab
    bw1_ref : (3, W*Cin,  W*Cout)   bf16  banded conv1 weights (BN scale + width pad folded)
    sh1_ref : (1, W*Cout)           f32   tiled conv1 shift ((bias-mean)*scale+beta)
    bw2_ref : (3, W*Cout, W*Cout)   bf16  banded conv2 weights
    sh2_ref : (1, W*Cout)           f32   tiled conv2 shift
    out_ref : (Nb, H, W*Cout)       bf16  lane-dense output slab
    xp_s    : (Nb*(H+2), W*Cin)     bf16  vertically padded conv1 input (per-batch halos)
    y1p_s   : (Nb*(H+2), W*Cout)    bf16  vertically padded conv2 input
    """
    Hp = H + 2
    rows = Nb * Hp - 2                       # rows of each banded matmul output

    # Zero only the vertical halo rows (interior is fully overwritten every step; the
    # width padding is absorbed into the banded weights, so there are no edge columns).
    zc1 = jnp.zeros((1, W * Cin), xp_s.dtype)
    zc2 = jnp.zeros((1, W * Cout), y1p_s.dtype)
    for b in range(Nb):
        base = b * Hp
        xp_s[base:base + 1, :] = zc1
        xp_s[base + H + 1:base + H + 2, :] = zc1
        y1p_s[base:base + 1, :] = zc2
        y1p_s[base + H + 1:base + H + 2, :] = zc2
        # Interior store: bf16, column 0, full width -> unmasked lane-dense vst.
        xp_s[base + 1:base + 1 + H, :] = x_ref[b]

    def conv_bn_relu(src_s, bw_ref, sh_ref):
        src = src_s[...]                                     # bf16 slab (Nb*Hp, W*C)
        acc = jnp.zeros((rows, W * Cout), jnp.float32)
        for dh in range(3):                                  # 3 MXU matmuls per conv
            acc = acc + jnp.dot(src[dh:dh + rows, :], bw_ref[dh],
                                preferred_element_type=jnp.float32)
        return jnp.maximum(acc + sh_ref[0], 0.0)             # fused BN shift + ReLU

    y1 = conv_bn_relu(xp_s, bw1_ref, sh1_ref)                # (rows, W*Cout) f32
    # Intermediate activation stays in VMEM (no HBM round trip); cast to bf16 once.
    for b in range(Nb):
        base = b * Hp
        y1p_s[base + 1:base + 1 + H, :] = y1[base:base + H].astype(y1p_s.dtype)

    y2 = conv_bn_relu(y1p_s, bw2_ref, sh2_ref)               # (rows, W*Cout) f32
    for b in range(Nb):
        out_ref[b] = y2[b * Hp:b * Hp + H].astype(out_ref.dtype)


def _fold_bn(bias, gamma, beta, mean, var, eps=1e-5):
    """Fold conv bias + inference-mode BatchNorm into per-channel scale/shift."""
    scale = gamma / jnp.sqrt(var + eps)
    shift = (bias - mean) * scale + beta
    return scale, shift


def _banded_weights(w_oihw, scale, W):
    """Banded matmul weights over UNPADDED columns: B[dh] of shape (W*Cin, W*Cout), bf16.

    conv_out[h, wo*Cout+co] = sum_dh (xpad[h+dh, :] @ B[dh])[wo*Cout+co]
    where xpad is the input zero-padded ONLY along H, viewed as (H+2, W*Cin).
    The horizontal (width) zero padding is folded into the band: taps with
    |w_in - w_out| > 1 are simply absent (zero) in B.
    """
    w_hwio = jnp.transpose(w_oihw, (2, 3, 1, 0)) * scale[None, None, None, :]  # (3,3,Ci,Co)
    _, _, Cin, Cout = w_hwio.shape
    wi = jnp.arange(W)[:, None]                    # input column
    wo = jnp.arange(W)[None, :]                    # output column
    dw = wi - wo + 1                               # tap index; valid taps in {0,1,2}
    valid = ((dw >= 0) & (dw <= 2)).astype(w_hwio.dtype)
    dw_c = jnp.clip(dw, 0, 2)
    # T[dh, wi, wo, ci, co] = w_hwio[dh, wi-wo+1, ci, co] if |wi-wo| <= 1 else 0
    T = w_hwio[:, dw_c, :, :] * valid[None, :, :, None, None]   # (3, W, W, Cin, Cout)
    T = jnp.transpose(T, (0, 1, 3, 2, 4))                       # (3, W, Cin, W, Cout)
    return T.reshape(3, W * Cin, W * Cout).astype(jnp.bfloat16)


def double_conv_pallas(x_nhwc, w1_oihw, b1, g1, be1, m1, v1,
                       w2_oihw, b2, g2, be2, m2, v2,
                       *, batch_block=None, out_dtype=jnp.bfloat16):
    """x_nhwc: (N,H,W,Cin) float32. Returns (N,H,W,Cout) in `out_dtype`."""
    N, H, W, Cin = x_nhwc.shape
    Cout = w1_oihw.shape[0]

    s1, sh1 = _fold_bn(b1, g1, be1, m1, v1)
    s2, sh2 = _fold_bn(b2, g2, be2, m2, v2)
    bw1 = _banded_weights(w1_oihw, s1, W)                 # (3, W*Cin,  W*Cout) bf16
    bw2 = _banded_weights(w2_oihw, s2, W)                 # (3, W*Cout, W*Cout) bf16
    sh1_t = jnp.tile(sh1, W).reshape(1, W * Cout).astype(jnp.float32)
    sh2_t = jnp.tile(sh2, W).reshape(1, W * Cout).astype(jnp.float32)

    # Lane-packed (rows, W*Cin) layout; bf16 activations halve input HBM traffic.
    x2d = x_nhwc.astype(jnp.bfloat16).reshape(N, H, W * Cin)

    if batch_block is None:
        # Keep >= 2 grid steps when N allows (both v7x TensorCores get work) while still
        # batching rows per step (M = Nb*(H+2)-2) to amortize per-step overhead.
        batch_block = N // 2 if (N >= 2 and N % 2 == 0) else 1
    assert N % batch_block == 0, (N, batch_block)
    Nb = batch_block
    n_steps = N // Nb

    kernel = functools.partial(_double_conv_kernel, Nb=Nb, H=H, W=W, Cin=Cin, Cout=Cout)
    out = pl.pallas_call(
        kernel,
        out_shape=jax.ShapeDtypeStruct((N, H, W * Cout), out_dtype),
        grid=(n_steps,),
        in_specs=[
            pl.BlockSpec((Nb, H, W * Cin), lambda n: (n, 0, 0)),
            pl.BlockSpec((3, W * Cin, W * Cout), lambda n: (0, 0, 0)),
            pl.BlockSpec((1, W * Cout), lambda n: (0, 0)),
            pl.BlockSpec((3, W * Cout, W * Cout), lambda n: (0, 0, 0)),
            pl.BlockSpec((1, W * Cout), lambda n: (0, 0)),
        ],
        out_specs=pl.BlockSpec((Nb, H, W * Cout), lambda n: (n, 0, 0)),
        scratch_shapes=[
            pltpu.VMEM((Nb * (H + 2), W * Cin), jnp.bfloat16),
            pltpu.VMEM((Nb * (H + 2), W * Cout), jnp.bfloat16),
        ],
        compiler_params=pltpu.CompilerParams(dimension_semantics=("parallel",)),
    )(x2d, bw1, sh1_t, bw2, sh2_t)
    return out.reshape(N, H, W, Cout)


def init_inconv_params(key, in_ch, out_ch):
    """Deterministic synthetic parameters matching the PyTorch module shapes."""
    ks = jax.random.split(key, 8)
    p = {}
    p["w1"] = jax.random.normal(ks[0], (out_ch, in_ch, 3, 3), jnp.float32) * 0.1
    p["b1"] = jax.random.normal(ks[1], (out_ch,), jnp.float32) * 0.1
    p["g1"] = 1.0 + 0.1 * jax.random.normal(ks[2], (out_ch,), jnp.float32)
    p["be1"] = 0.1 * jax.random.normal(ks[3], (out_ch,), jnp.float32)
    p["m1"] = jnp.zeros((out_ch,), jnp.float32)
    p["v1"] = jnp.ones((out_ch,), jnp.float32)
    p["w2"] = jax.random.normal(ks[4], (out_ch, out_ch, 3, 3), jnp.float32) * 0.1
    p["b2"] = jax.random.normal(ks[5], (out_ch,), jnp.float32) * 0.1
    p["g2"] = 1.0 + 0.1 * jax.random.normal(ks[6], (out_ch,), jnp.float32)
    p["be2"] = 0.1 * jax.random.normal(ks[7], (out_ch,), jnp.float32)
    p["m2"] = jnp.zeros((out_ch,), jnp.float32)
    p["v2"] = jnp.ones((out_ch,), jnp.float32)
    return p


@jax.jit
def inconv_forward(x_nchw, params):
    """Forward pass of `inconv` (== double_conv). Input/output are NCHW float32."""
    x = jnp.transpose(x_nchw, (0, 2, 3, 1))             # NCHW -> NHWC
    y = double_conv_pallas(
        x,
        params["w1"], params["b1"], params["g1"], params["be1"], params["m1"], params["v1"],
        params["w2"], params["b2"], params["g2"], params["be2"], params["m2"], params["v2"])
    y = jnp.transpose(y, (0, 3, 1, 2))                   # NHWC -> NCHW (bf16, cheap)
    return y.astype(jnp.float32)                         # preserve module output dtype


def _reference_forward(x_nchw, params):
    """Pure-JAX reference (lax conv, f32) for validation."""
    def step(x, w_oihw, b, g, be, m, v):
        y = jax.lax.conv_general_dilated(
            x, w_oihw, window_strides=(1, 1), padding=((1, 1), (1, 1)),
            dimension_numbers=("NCHW", "OIHW", "NCHW"))
        y = y + b[None, :, None, None]
        y = (y - m[None, :, None, None]) / jnp.sqrt(v[None, :, None, None] + 1e-5)
        y = y * g[None, :, None, None] + be[None, :, None, None]
        return jnp.maximum(y, 0.0)

    y = step(x_nchw, params["w1"], params["b1"], params["g1"], params["be1"],
             params["m1"], params["v1"])
    y = step(y, params["w2"], params["b2"], params["g2"], params["be2"],
             params["m2"], params["v2"])
    return y


if __name__ == "__main__":
    key = jax.random.PRNGKey(0)
    k_x, k_p = jax.random.split(key)

    N, in_ch, out_ch, H, W = 2, 4, 8, 16, 16
    x = jax.random.normal(k_x, (N, in_ch, H, W), jnp.float32)
    params = init_inconv_params(k_p, in_ch, out_ch)

    out = inconv_forward(x, params)
    out = jax.block_until_ready(out)

    ref = _reference_forward(x, params)
    assert out.shape == (N, out_ch, H, W), out.shape
    # bf16 matmul operands, bf16 intermediate activation and bf16 output slab
    # (f32 accumulation) -> relaxed tolerance vs. the pure-f32 reference.
    assert jnp.allclose(out, ref, atol=1e-1, rtol=5e-2), (
        float(jnp.max(jnp.abs(out - ref))))

    print("KERNEL_OK")
</pallas_src>

<mosaic_0001>
module attributes {stable_mosaic.version = 11 : i64} {
  func.func @_double_conv_kernel(%arg0: i32, %arg1: memref<1x16x64xbf16, #tpu.memory_space<vmem>>, %arg2: memref<3x64x128xbf16, #tpu.memory_space<vmem>>, %arg3: memref<1x128xf32, #tpu.memory_space<vmem>>, %arg4: memref<3x128x128xbf16, #tpu.memory_space<vmem>>, %arg5: memref<1x128xf32, #tpu.memory_space<vmem>>, %arg6: memref<1x16x128xbf16, #tpu.memory_space<vmem>>, %arg7: memref<18x64xbf16, #tpu.memory_space<vmem>>, %arg8: memref<18x128xbf16, #tpu.memory_space<vmem>>) attributes {dimension_semantics = [#tpu.dimension_semantics<parallel>], iteration_bounds = array<i64: 2>, scalar_prefetch = 0 : i64, scratch_operands = 2 : i64, tpu.core_type = #tpu.core_type<tc>, window_params = [{transform_indices = @transform_0, window_bounds = array<i64: 1, 16, 64>}, {pipeline_mode = #tpu.pipeline_mode<synchronous>, transform_indices = @transform_1, window_bounds = array<i64: 3, 64, 128>}, {pipeline_mode = #tpu.pipeline_mode<synchronous>, transform_indices = @transform_2, window_bounds = array<i64: 1, 128>}, {pipeline_mode = #tpu.pipeline_mode<synchronous>, transform_indices = @transform_3, window_bounds = array<i64: 3, 128, 128>}, {pipeline_mode = #tpu.pipeline_mode<synchronous>, transform_indices = @transform_4, window_bounds = array<i64: 1, 128>}, {transform_indices = @transform_5, window_bounds = array<i64: 1, 16, 128>}]} {
    %cst = arith.constant 0.000000e+00 : bf16
    %0 = vector.broadcast %cst : bf16 to vector<1x64xbf16>
    %cst_0 = arith.constant 0.000000e+00 : bf16
    %1 = vector.broadcast %cst_0 : bf16 to vector<1x128xbf16>
    %c0 = arith.constant 0 : index
    %c0_1 = arith.constant 0 : index
    %2 = vector.load %arg7[%c0, %c0_1] : memref<18x64xbf16, #tpu.memory_space<vmem>>, vector<1x64xbf16>
    tpu.vector_store %arg7[%c0, %c0_1], %0 {strides = array<i32>} : memref<18x64xbf16, #tpu.memory_space<vmem>>, vector<1x64xbf16>,
    %c17 = arith.constant 17 : index
    %c0_2 = arith.constant 0 : index
    %3 = vector.load %arg7[%c17, %c0_2] : memref<18x64xbf16, #tpu.memory_space<vmem>>, vector<1x64xbf16>
    tpu.vector_store %arg7[%c17, %c0_2], %0 {strides = array<i32>} : memref<18x64xbf16, #tpu.memory_space<vmem>>, vector<1x64xbf16>,
    %c0_3 = arith.constant 0 : index
    %c0_4 = arith.constant 0 : index
    %4 = vector.load %arg8[%c0_3, %c0_4] : memref<18x128xbf16, #tpu.memory_space<vmem>>, vector<1x128xbf16>
    tpu.vector_store %arg8[%c0_3, %c0_4], %1 {strides = array<i32>} : memref<18x128xbf16, #tpu.memory_space<vmem>>, vector<1x128xbf16>,
    %c17_5 = arith.constant 17 : index
    %c0_6 = arith.constant 0 : index
    %5 = vector.load %arg8[%c17_5, %c0_6] : memref<18x128xbf16, #tpu.memory_space<vmem>>, vector<1x128xbf16>
    tpu.vector_store %arg8[%c17_5, %c0_6], %1 {strides = array<i32>} : memref<18x128xbf16, #tpu.memory_space<vmem>>, vector<1x128xbf16>,
    %c0_7 = arith.constant 0 : index
    %c0_8 = arith.constant 0 : index
    %c0_9 = arith.constant 0 : index
    %6 = vector.load %arg1[%c0_7, %c0_8, %c0_9] : memref<1x16x64xbf16, #tpu.memory_space<vmem>>, vector<1x16x64xbf16>
    %7 = vector.shape_cast %6 : vector<1x16x64xbf16> to vector<16x64xbf16>
    %c1 = arith.constant 1 : index
    %c0_10 = arith.constant 0 : index
    %8 = vector.load %arg7[%c1, %c0_10] : memref<18x64xbf16, #tpu.memory_space<vmem>>, vector<16x64xbf16>
    tpu.vector_store %arg7[%c1, %c0_10], %7 {strides = array<i32>} : memref<18x64xbf16, #tpu.memory_space<vmem>>, vector<16x64xbf16>,
    %c0_11 = arith.constant 0 : index
    %c0_12 = arith.constant 0 : index
    %9 = vector.load %arg7[%c0_11, %c0_12] : memref<18x64xbf16, #tpu.memory_space<vmem>>, vector<18x64xbf16>
    %cst_13 = arith.constant 0.000000e+00 : f32
    %10 = vector.broadcast %cst_13 : f32 to vector<16x128xf32>
    %11 = vector.extract_strided_slice %9 {offsets = [0, 0], sizes = [16, 64], strides = [1, 1]} : vector<18x64xbf16> to vector<16x64xbf16>
    %c0_14 = arith.constant 0 : index
    %c0_15 = arith.constant 0 : index
    %c0_16 = arith.constant 0 : index
    %12 = vector.load %arg2[%c0_14, %c0_15, %c0_16] : memref<3x64x128xbf16, #tpu.memory_space<vmem>>, vector<1x64x128xbf16>
    %13 = vector.shape_cast %12 : vector<1x64x128xbf16> to vector<64x128xbf16>
    %cst_17 = arith.constant dense<0.000000e+00> : vector<16x128xf32>
    %14 = tpu.matmul %11, %13, %cst_17 {dimension_numbers = #tpu.dot_dimension_numbers<[1], [0], [0], [1], [0, 0, 1, 1], [], []>} : vector<16x64xbf16>, vector<64x128xbf16>, vector<16x128xf32> -> vector<16x128xf32>
    %15 = arith.addf %10, %14 : vector<16x128xf32>
    %16 = vector.extract_strided_slice %9 {offsets = [1, 0], sizes = [16, 64], strides = [1, 1]} : vector<18x64xbf16> to vector<16x64xbf16>
    %c1_18 = arith.constant 1 : index
    %c0_19 = arith.constant 0 : index
    %c0_20 = arith.constant 0 : index
    %17 = vector.load %arg2[%c1_18, %c0_19, %c0_20] : memref<3x64x128xbf16, #tpu.memory_space<vmem>>, vector<1x64x128xbf16>
    %18 = vector.shape_cast %17 : vector<1x64x128xbf16> to vector<64x128xbf16>
    %cst_21 = arith.constant dense<0.000000e+00> : vector<16x128xf32>
    %19 = tpu.matmul %16, %18, %cst_21 {dimension_numbers = #tpu.dot_dimension_numbers<[1], [0], [0], [1], [0, 0, 1, 1], [], []>} : vector<16x64xbf16>, vector<64x128xbf16>, vector<16x128xf32> -> vector<16x128xf32>
    %20 = arith.addf %15, %19 : vector<16x128xf32>
    %21 = vector.extract_strided_slice %9 {offsets = [2, 0], sizes = [16, 64], strides = [1, 1]} : vector<18x64xbf16> to vector<16x64xbf16>
    %c2 = arith.constant 2 : index
    %c0_22 = arith.constant 0 : index
    %c0_23 = arith.constant 0 : index
    %22 = vector.load %arg2[%c2, %c0_22, %c0_23] : memref<3x64x128xbf16, #tpu.memory_space<vmem>>, vector<1x64x128xbf16>
    %23 = vector.shape_cast %22 : vector<1x64x128xbf16> to vector<64x128xbf16>
    %cst_24 = arith.constant dense<0.000000e+00> : vector<16x128xf32>
    %24 = tpu.matmul %21, %23, %cst_24 {dimension_numbers = #tpu.dot_dimension_numbers<[1], [0], [0], [1], [0, 0, 1, 1], [], []>} : vector<16x64xbf16>, vector<64x128xbf16>, vector<16x128xf32> -> vector<16x128xf32>
    %25 = arith.addf %20, %24 : vector<16x128xf32>
    %c0_25 = arith.constant 0 : index
    %c0_26 = arith.constant 0 : index
    %26 = vector.load %arg3[%c0_25, %c0_26] : memref<1x128xf32, #tpu.memory_space<vmem>>, vector<1x128xf32>
    %27 = vector.shape_cast %26 : vector<1x128xf32> to vector<128xf32>
    %28 = vector.shape_cast %27 : vector<128xf32> to vector<1x128xf32>
    %29 = vector.broadcast %28 : vector<1x128xf32> to vector<16x128xf32>
    %30 = arith.addf %25, %29 : vector<16x128xf32>
    %cst_27 = arith.constant 0.000000e+00 : f32
    %31 = vector.broadcast %cst_27 : f32 to vector<16x128xf32>
    %32 = arith.maximumf %30, %31 : vector<16x128xf32>
    %33 = arith.truncf %32 : vector<16x128xf32> to vector<16x128xbf16>
    %c1_28 = arith.constant 1 : index
    %c0_29 = arith.constant 0 : index
    %34 = vector.load %arg8[%c1_28, %c0_29] : memref<18x128xbf16, #tpu.memory_space<vmem>>, vector<16x128xbf16>
    tpu.vector_store %arg8[%c1_28, %c0_29], %33 {strides = array<i32>} : memref<18x128xbf16, #tpu.memory_space<vmem>>, vector<16x128xbf16>,
    %c0_30 = arith.constant 0 : index
    %c0_31 = arith.constant 0 : index
    %35 = vector.load %arg8[%c0_30, %c0_31] : memref<18x128xbf16, #tpu.memory_space<vmem>>, vector<18x128xbf16>
    %cst_32 = arith.constant 0.000000e+00 : f32
    %36 = vector.broadcast %cst_32 : f32 to vector<16x128xf32>
    %37 = vector.extract_strided_slice %35 {offsets = [0, 0], sizes = [16, 128], strides = [1, 1]} : vector<18x128xbf16> to vector<16x128xbf16>
    %c0_33 = arith.constant 0 : index
    %c0_34 = arith.constant 0 : index
    %c0_35 = arith.constant 0 : index
    %38 = vector.load %arg4[%c0_33, %c0_34, %c0_35] : memref<3x128x128xbf16, #tpu.memory_space<vmem>>, vector<1x128x128xbf16>
    %39 = vector.shape_cast %38 : vector<1x128x128xbf16> to vector<128x128xbf16>
    %cst_36 = arith.constant dense<0.000000e+00> : vector<16x128xf32>
    %40 = tpu.matmul %37, %39, %cst_36 {dimension_numbers = #tpu.dot_dimension_numbers<[1], [0], [0], [1], [0, 0, 1, 1], [], []>} : vector<16x128xbf16>, vector<128x128xbf16>, vector<16x128xf32> -> vector<16x128xf32>
    %41 = arith.addf %36, %40 : vector<16x128xf32>
    %42 = vector.extract_strided_slice %35 {offsets = [1, 0], sizes = [16, 128], strides = [1, 1]} : vector<18x128xbf16> to vector<16x128xbf16>
    %c1_37 = arith.constant 1 : index
    %c0_38 = arith.constant 0 : index
    %c0_39 = arith.constant 0 : index
    %43 = vector.load %arg4[%c1_37, %c0_38, %c0_39] : memref<3x128x128xbf16, #tpu.memory_space<vmem>>, vector<1x128x128xbf16>
    %44 = vector.shape_cast %43 : vector<1x128x128xbf16> to vector<128x128xbf16>
    %cst_40 = arith.constant dense<0.000000e+00> : vector<16x128xf32>
    %45 = tpu.matmul %42, %44, %cst_40 {dimension_numbers = #tpu.dot_dimension_numbers<[1], [0], [0], [1], [0, 0, 1, 1], [], []>} : vector<16x128xbf16>, vector<128x128xbf16>, vector<16x128xf32> -> vector<16x128xf32>
    %46 = arith.addf %41, %45 : vector<16x128xf32>
    %47 = vector.extract_strided_slice %35 {offsets = [2, 0], sizes = [16, 128], strides = [1, 1]} : vector<18x128xbf16> to vector<16x128xbf16>
    %c2_41 = arith.constant 2 : index
    %c0_42 = arith.constant 0 : index
    %c0_43 = arith.constant 0 : index
    %48 = vector.load %arg4[%c2_41, %c0_42, %c0_43] : memref<3x128x128xbf16, #tpu.memory_space<vmem>>, vector<1x128x128xbf16>
    %49 = vector.shape_cast %48 : vector<1x128x128xbf16> to vector<128x128xbf16>
    %cst_44 = arith.constant dense<0.000000e+00> : vector<16x128xf32>
    %50 = tpu.matmul %47, %49, %cst_44 {dimension_numbers = #tpu.dot_dimension_numbers<[1], [0], [0], [1], [0, 0, 1, 1], [], []>} : vector<16x128xbf16>, vector<128x128xbf16>, vector<16x128xf32> -> vector<16x128xf32>
    %51 = arith.addf %46, %50 : vector<16x128xf32>
    %c0_45 = arith.constant 0 : index
    %c0_46 = arith.constant 0 : index
    %52 = vector.load %arg5[%c0_45, %c0_46] : memref<1x128xf32, #tpu.memory_space<vmem>>, vector<1x128xf32>
    %53 = vector.shape_cast %52 : vector<1x128xf32> to vector<128xf32>
    %54 = vector.shape_cast %53 : vector<128xf32> to vector<1x128xf32>
    %55 = vector.broadcast %54 : vector<1x128xf32> to vector<16x128xf32>
    %56 = arith.addf %51, %55 : vector<16x128xf32>
    %cst_47 = arith.constant 0.000000e+00 : f32
    %57 = vector.broadcast %cst_47 : f32 to vector<16x128xf32>
    %58 = arith.maximumf %56, %57 : vector<16x128xf32>
    %59 = arith.truncf %58 : vector<16x128xf32> to vector<16x128xbf16>
    %c0_48 = arith.constant 0 : index
    %c0_49 = arith.constant 0 : index
    %c0_50 = arith.constant 0 : index
    %60 = vector.load %arg6[%c0_48, %c0_49, %c0_50] : memref<1x16x128xbf16, #tpu.memory_space<vmem>>, vector<1x16x128xbf16>
    %61 = vector.shape_cast %60 : vector<1x16x128xbf16> to vector<16x128xbf16>
    %62 = vector.shape_cast %59 : vector<16x128xbf16> to vector<1x16x128xbf16>
    tpu.vector_store %arg6[%c0_48, %c0_49, %c0_50], %62 {strides = array<i32>} : memref<1x16x128xbf16, #tpu.memory_space<vmem>>, vector<1x16x128xbf16>,
    return
  }
  func.func @transform_0(%arg0: i32) -> (i32, i32, i32) {
    %c0_i32 = arith.constant 0 : i32
    %c0_i32_0 = arith.constant 0 : i32
    %c0_i32_1 = arith.constant 0 : i32
    return %arg0, %c0_i32, %c0_i32_0 : i32, i32, i32
  }
  func.func @transform_1(%arg0: i32) -> (i32, i32, i32) {
    %c0_i32 = arith.constant 0 : i32
    %c0_i32_0 = arith.constant 0 : i32
    %c0_i32_1 = arith.constant 0 : i32
    %c0_i32_2 = arith.constant 0 : i32
    return %c0_i32, %c0_i32_0, %c0_i32_1 : i32, i32, i32
  }
  func.func @transform_2(%arg0: i32) -> (i32, i32) {
    %c0_i32 = arith.constant 0 : i32
    %c0_i32_0 = arith.constant 0 : i32
    %c0_i32_1 = arith.constant 0 : i32
    return %c0_i32, %c0_i32_0 : i32, i32
  }
  func.func @transform_3(%arg0: i32) -> (i32, i32, i32) {
    %c0_i32 = arith.constant 0 : i32
    %c0_i32_0 = arith.constant 0 : i32
    %c0_i32_1 = arith.constant 0 : i32
    %c0_i32_2 = arith.constant 0 : i32
    return %c0_i32, %c0_i32_0, %c0_i32_1 : i32, i32, i32
  }
  func.func @transform_4(%arg0: i32) -> (i32, i32) {
    %c0_i32 = arith.constant 0 : i32
    %c0_i32_0 = arith.constant 0 : i32
    %c0_i32_1 = arith.constant 0 : i32
    return %c0_i32, %c0_i32_0 : i32, i32
  }
  func.func @transform_5(%arg0: i32) -> (i32, i32, i32) {
    %c0_i32 = arith.constant 0 : i32
    %c0_i32_0 = arith.constant 0 : i32
    %c0_i32_1 = arith.constant 0 : i32
    return %arg0, %c0_i32, %c0_i32_0 : i32, i32, i32
  }
}

</mosaic_0001>

<llo_original>
// kernel: tile.13
$region0: #{tile.13}
  #allocation0 [shape = 's32[1]{0}', space=sflag, size = 0x4, scoped, tag = 'scoped memory for tile.13']
  %s0 = inlined_call_operand.vmem [shape: f32[8], index: 0, kind: input, shape index: {}]
  %s1 = inlined_call_operand.vmem [shape: f32[16,8], index: 1, kind: output, shape index: {}]
  // Predicated region
  $region2: #{tile.13} parent=0 // pred_check
    _
  $region3: #{tile.13} parent=0 // pred_check_branch
    %3 = sbr.rel (0) target = $region5
  $region4: #{tile.13} parent=0 // pred_region
    _
  $region5: #{tile.13} parent=0 // pred_fallthru
    _
  %v4 = vld [vmem:[%s0] ss:$0 sm:$0xff]
  %5 = vst [vmem:[%s1] sm:$0xff] %v4
  %s6 = scalar_lea.vmem %s1, 8
  %7 = vst [vmem:[%s6] sm:$0xff] %v4

// kernel: tile.14
$region0: #{tile.14}
  %s0 = inlined_call_operand.vmem [shape: f32[16,8], index: 0, kind: input, shape index: {}]
  %s1 = inlined_call_operand.vmem [shape: f32[1,128], index: 1, kind: output, shape index: {}]
  $region1: #{tile.14} parent=0
    #allocation0 [shape = 'u8[4096]{0}', space=vmem, size = 0x1000, scoped, tag = 'scoped mem for output reshape']
    %v2 = vld [vmem:[%s0] sm:$0x1]
    %vm3 = vcmask 64512
    %4 = vst.msk [vmem:[#allocation0] sm:$0x1] %vm3, %v2
    %s5 = scalar_lea.vmem %s0, 15
    %v6 = vld [vmem:[%s5] sm:$0x1]
    %7 = vrot.lane.b32.xlu0 %v6, 120
    %v8 = vpop.permute.xlu0 %7
    %vm9 = vcmask 1048512
    %10 = vst.msk [vmem:[#allocation0] sm:$0x1] %vm9, %v8
    %s11 = scalar_lea.vmem %s0, 14
    %v12 = vld [vmem:[%s11] sm:$0x1]
    %13 = vrot.lane.b32.xlu0 %v12, 112
    %v14 = vpop.permute.xlu0 %13
    %vm15 = vcmask 982912
    %16 = vst.msk [vmem:[#allocation0] sm:$0x1] %vm15, %v14
    %s17 = scalar_lea.vmem %s0, 13
    %v18 = vld [vmem:[%s17] sm:$0x1]
    %19 = vrot.lane.b32.xlu0 %v18, 104
    %v20 = vpop.permute.xlu0 %19
    %vm21 = vcmask 917312
    %22 = vst.msk [vmem:[#allocation0] sm:$0x1] %vm21, %v20
    %s23 = scalar_lea.vmem %s0, 12
    %v24 = vld [vmem:[%s23] sm:$0x1]
    %25 = vrot.lane.b32.xlu0 %v24, 96
    %v26 = vpop.permute.xlu0 %25
    %vm27 = vcmask 851712
    %28 = vst.msk [vmem:[#allocation0] sm:$0x1] %vm27, %v26
    %s29 = scalar_lea.vmem %s0, 11
    %v30 = vld [vmem:[%s29] sm:$0x1]
    %31 = vrot.lane.b32.xlu0 %v30, 88
    %v32 = vpop.permute.xlu0 %31
    %vm33 = vcmask 786112
    %34 = vst.msk [vmem:[#allocation0] sm:$0x1] %vm33, %v32
    %s35 = scalar_lea.vmem %s0, 10
    %v36 = vld [vmem:[%s35] sm:$0x1]
    %37 = vrot.lane.b32.xlu0 %v36, 80
    %v38 = vpop.permute.xlu0 %37
    %vm39 = vcmask 720512
    %40 = vst.msk [vmem:[#allocation0] sm:$0x1] %vm39, %v38
    %s41 = scalar_lea.vmem %s0, 9
    %v42 = vld [vmem:[%s41] sm:$0x1]
    %43 = vrot.lane.b32.xlu0 %v42, 72
    %v44 = vpop.permute.xlu0 %43
    %vm45 = vcmask 654912
    %46 = vst.msk [vmem:[#allocation0] sm:$0x1] %vm45, %v44
    %s47 = scalar_lea.vmem %s0, 8
    %v48 = vld [vmem:[%s47] sm:$0x1]
    %49 = vrot.lane.b32.xlu0 %v48, 64
    %v50 = vpop.permute.xlu0 %49
    %vm51 = vcmask 589312
    %52 = vst.msk [vmem:[#allocation0] sm:$0x1] %vm51, %v50
    %s53 = scalar_lea.vmem %s0, 7
    %v54 = vld [vmem:[%s53] sm:$0x1]
    %55 = vrot.lane.b32.xlu0 %v54, 56
    %v56 = vpop.permute.xlu0 %55
    %vm57 = vcmask 523712
    %58 = vst.msk [vmem:[#allocation0] sm:$0x1] %vm57, %v56
    %s59 = scalar_lea.vmem %s0, 6
    %v60 = vld [vmem:[%s59] sm:$0x1]
    %61 = vrot.lane.b32.xlu0 %v60, 48
    %v62 = vpop.permute.xlu0 %61
    %vm63 = vcmask 458112
    %64 = vst.msk [vmem:[#allocation0] sm:$0x1] %vm63, %v62
    %s65 = scalar_lea.vmem %s0, 5
    %v66 = vld [vmem:[%s65] sm:$0x1]
    %67 = vrot.lane.b32.xlu0 %v66, 40
    %v68 = vpop.permute.xlu0 %67
    %vm69 = vcmask 392512
    %70 = vst.msk [vmem:[#allocation0] sm:$0x1] %vm69, %v68
    %s71 = scalar_lea.vmem %s0, 4
    %v72 = vld [vmem:[%s71] sm:$0x1]
    %73 = vrot.lane.b32.xlu0 %v72, 32
    %v74 = vpop.permute.xlu0 %73
    %vm75 = vcmask 326912
    %76 = vst.msk [vmem:[#allocation0] sm:$0x1] %vm75, %v74
    %s77 = scalar_lea.vmem %s0, 3
    %v78 = vld [vmem:[%s77] sm:$0x1]
    %79 = vrot.lane.b32.xlu0 %v78, 24
    %v80 = vpop.permute.xlu0 %79
    %vm81 = vcmask 261312
    %82 = vst.msk [vmem:[#allocation0] sm:$0x1] %vm81, %v80
    %s83 = scalar_lea.vmem %s0, 2
    %v84 = vld [vmem:[%s83] sm:$0x1]
    %85 = vrot.lane.b32.xlu0 %v84, 16
    %v86 = vpop.permute.xlu0 %85
    %vm87 = vcmask 195712
    %88 = vst.msk [vmem:[#allocation0] sm:$0x1] %vm87, %v86
    %s89 = scalar_lea.vmem %s0, 1
    %v90 = vld [vmem:[%s89] sm:$0x1]
    %91 = vrot.lane.b32.xlu0 %v90, 8
    %v92 = vpop.permute.xlu0 %91
    %vm93 = vcmask 130112
    %94 = vst.msk [vmem:[#allocation0] sm:$0x1] %vm93, %v92
    %s96 = ssub.s32 2, 1
    %v97 = vld [vmem:[#allocation0] sm:%s96]
    %s99 = ssub.s32 2, 1
    %100 = vst [vmem:[%s1] sm:%s99] %v97

// kernel: inconv_forward.1
$region0: #{inconv_forward.1}
  #allocation0 [shape = 'u32[]', space=smem, size = 0x4, offset = 0x4, fixed_abs, tag = 'smem constant byte address 0x4 - core index']
  #allocation1 [shape = 'u32[72,128]{1,0:T(1,128)}', space=vmem, size = 0x9000, scoped, tag = 'internal scratch']
  #allocation2 [shape = 'bf16[18,64]{1,0:T(8,128)(2,1)}', space=vmem, size = 0x1800, scoped, tag = 'scratch operand']
  #allocation3 [shape = 'bf16[18,128]{1,0:T(8,128)(2,1)}', space=vmem, size = 0x1800, scoped, tag = 'scratch operand']
  %s0 = inlined_call_operand.vmem [shape: bf16[2,16,64], index: 0, kind: input, shape index: {}]
  %s1 = inlined_call_operand.vmem [shape: bf16[3,64,128], index: 1, kind: input, shape index: {}]
  %s2 = inlined_call_operand.vmem [shape: f32[1,128], index: 2, kind: input, shape index: {}]
  %s3 = inlined_call_operand.vmem [shape: bf16[3,128,128], index: 3, kind: input, shape index: {}]
  %s4 = inlined_call_operand.vmem [shape: f32[1,128], index: 4, kind: input, shape index: {}]
  %s5 = inlined_call_operand.vmem [shape: bf16[2,16,128], index: 5, kind: output, shape index: {}]
  %s6 = sld [smem:[#allocation0]]
  $region53: #{inconv_forward.1} parent=0
    _
  %s8 = ssub.s32 1, %s6
  %s9 = scalar_select 0, %s8, %s6
  loop: start=0, step=1, limit=4
  $region2: #{inconv_forward.1} parent=0 // loop_pre_header
    _
  $region3: #{inconv_forward.1} parent=0 // loop_header
    %s11 = sphi 0, %s15
    %p12 = scmp.ge.s32.totalorder %s11, 4
    %s21 = sphi 0, %s23
    %s24 = sphi 0, %s21
    %s25 = sphi 0, %s24
    %s41 = sphi 0, %s25
    %s45 = sphi 0, %s45
    %s47 = sphi 0, %s45
    %s48 = sphi 0, %s47
    %s62 = sphi 0, %s48
    %s66 = sphi 0, %s66
    %s68 = sphi 0, %s66
    %s69 = sphi 0, %s68
    %s83 = sphi 0, %s69
    %s87 = sphi 0, %s87
    %s89 = sphi 0, %s87
    %s90 = sphi 0, %s89
    %s104 = sphi 0, %s90
    %s108 = sphi 0, %s108
    %s110 = sphi 0, %s108
    %s111 = sphi 0, %s110
    %s125 = sphi 0, %s111
    %s131 = sphi 0, %s133
    %s134 = sphi 0, %s131
    %s135 = sphi 0, %s134
    %s151 = sphi 0, %s135
  $region4: #{inconv_forward.1} parent=0 // loop_header_branch
    %14 = sbr.rel (%p12) target = $region8
  $region5: #{inconv_forward.1} parent=0 // loop_body
    %s16 = ssub.s32 %s11, 1
    %s17 = ssub.s32 %s11, 2
    %s18 = sadd.s32 %s11, 1
    %s19 = ssub.s32 %s11, %s18
    %p20 = scmp.eq.s32.totalorder %s19, 0
    %s22 = sadd.s32 %s21, 1
    %s23 = scalar_select %p20, %s21, %s22
    %p26 = pneg %p20
    %p27 = scmp.eq.s32.totalorder %s11, 1
    %p28 = por %p26, %p27
    %p29 = scmp.ne.s32.totalorder %s21, %s24
    %p30 = scmp.eq.s32.totalorder %s11, 0
    %p31 = por %p29, %p30
    %p32 = scmp.ne.s32.totalorder %s21, %s24
    %p33 = scmp.eq.s32.totalorder %s16, 1
    %p34 = por %p32, %p33
    %p35 = scmp.ne.s32.totalorder %s24, %s25
    %p36 = scmp.eq.s32.totalorder %s16, 0
    %p37 = por %p35, %p36
    %p38 = scmp.ne.s32.totalorder %s24, %s25
    %p39 = scmp.eq.s32.totalorder %s17, 1
    %p40 = por %p38, %p39
    %p42 = scmp.ne.s32.totalorder %s25, %s41
    %p43 = scmp.eq.s32.totalorder %s17, 0
    %p44 = por %p42, %p43
    %s46 = sadd.s32 %s45, 1
    %p49 = scmp.eq.s32.totalorder %s11, 1
    %p50 = scmp.ne.s32.totalorder %s45, %s47
    %p51 = scmp.eq.s32.totalorder %s11, 0
    %p52 = por %p50, %p51
    %p53 = scmp.ne.s32.totalorder %s45, %s47
    %p54 = scmp.eq.s32.totalorder %s16, 1
    %p55 = por %p53, %p54
    %p56 = scmp.ne.s32.totalorder %s47, %s48
    %p57 = scmp.eq.s32.totalorder %s16, 0
    %p58 = por %p56, %p57
    %p59 = scmp.ne.s32.totalorder %s47, %s48
    %p60 = scmp.eq.s32.totalorder %s17, 1
    %p61 = por %p59, %p60
    %p63 = scmp.ne.s32.totalorder %s48, %s62
    %p64 = scmp.eq.s32.totalorder %s17, 0
    %p65 = por %p63, %p64
    %s67 = sadd.s32 %s66, 1
    %p70 = scmp.eq.s32.totalorder %s11, 1
    %p71 = scmp.ne.s32.totalorder %s66, %s68
    %p72 = scmp.eq.s32.totalorder %s11, 0
    %p73 = por %p71, %p72
    %p74 = scmp.ne.s32.totalorder %s66, %s68
    %p75 = scmp.eq.s32.totalorder %s16, 1
    %p76 = por %p74, %p75
    %p77 = scmp.ne.s32.totalorder %s68, %s69
    %p78 = scmp.eq.s32.totalorder %s16, 0
    %p79 = por %p77, %p78
    %p80 = scmp.ne.s32.totalorder %s68, %s69
    %p81 = scmp.eq.s32.totalorder %s17, 1
    %p82 = por %p80, %p81
    %p84 = scmp.ne.s32.totalorder %s69, %s83
    %p85 = scmp.eq.s32.totalorder %s17, 0
    %p86 = por %p84, %p85
    %s88 = sadd.s32 %s87, 1
    %p91 = scmp.eq.s32.totalorder %s11, 1
    %p92 = scmp.ne.s32.totalorder %s87, %s89
    %p93 = scmp.eq.s32.totalorder %s11, 0
    %p94 = por %p92, %p93
    %p95 = scmp.ne.s32.totalorder %s87, %s89
    %p96 = scmp.eq.s32.totalorder %s16, 1
    %p97 = por %p95, %p96
    %p98 = scmp.ne.s32.totalorder %s89, %s90
    %p99 = scmp.eq.s32.totalorder %s16, 0
    %p100 = por %p98, %p99
    %p101 = scmp.ne.s32.totalorder %s89, %s90
    %p102 = scmp.eq.s32.totalorder %s17, 1
    %p103 = por %p101, %p102
    %p105 = scmp.ne.s32.totalorder %s90, %s104
    %p106 = scmp.eq.s32.totalorder %s17, 0
    %p107 = por %p105, %p106
    %s109 = sadd.s32 %s108, 1
    %p112 = scmp.eq.s32.totalorder %s11, 1
    %p113 = scmp.ne.s32.totalorder %s108, %s110
    %p114 = scmp.eq.s32.totalorder %s11, 0
    %p115 = por %p113, %p114
    %p116 = scmp.ne.s32.totalorder %s108, %s110
    %p117 = scmp.eq.s32.totalorder %s16, 1
    %p118 = por %p116, %p117
    %p119 = scmp.ne.s32.totalorder %s110, %s111
    %p120 = scmp.eq.s32.totalorder %s16, 0
    %p121 = por %p119, %p120
    %p122 = scmp.ne.s32.totalorder %s110, %s111
    %p123 = scmp.eq.s32.totalorder %s17, 1
    %p124 = por %p122, %p123
    %p126 = scmp.ne.s32.totalorder %s111, %s125
    %p127 = scmp.eq.s32.totalorder %s17, 0
    %p128 = por %p126, %p127
    %s129 = ssub.s32 %s11, %s18
    %p130 = scmp.eq.s32.totalorder %s129, 0
    %s132 = sadd.s32 %s131, 1
    %s133 = scalar_select %p130, %s131, %s132
    %p136 = pneg %p130
    %p137 = scmp.eq.s32.totalorder %s11, 1
    %p138 = por %p136, %p137
    %p139 = scmp.ne.s32.totalorder %s131, %s134
    %p140 = scmp.eq.s32.totalorder %s11, 0
    %p141 = por %p139, %p140
    %p142 = scmp.ne.s32.totalorder %s131, %s134
    %p143 = scmp.eq.s32.totalorder %s16, 1
    %p144 = por %p142, %p143
    %p145 = scmp.ne.s32.totalorder %s134, %s135
    %p146 = scmp.eq.s32.totalorder %s16, 0
    %p147 = por %p145, %p146
    %p148 = scmp.ne.s32.totalorder %s134, %s135
    %p149 = scmp.eq.s32.totalorder %s17, 1
    %p150 = por %p148, %p149
    %p152 = scmp.ne.s32.totalorder %s135, %s151
    %p153 = scmp.eq.s32.totalorder %s17, 0
    %p154 = por %p152, %p153
    %p155 = scmp.le.s32.totalorder 1, %s11
    %p156 = scmp.lt.s32.totalorder %s11, 3
    %p157 = pnand %p155, %p156
    %p158 = pneg %p157
    // Predicated region
    $region9: #{inconv_forward.1} parent=5 // pred_check
      _
    $region10: #{inconv_forward.1} parent=5 // pred_check_branch
      %160 = sbr.rel (%p157) target = $region12
    $region11: #{inconv_forward.1} parent=5 // pred_region
      %s161 = ssub.s32 %s11, 1
      // Predicated region
      $region13: #{inconv_forward.1} parent=11 // pred_check
        %p162 = pneg %p58
      $region14: #{inconv_forward.1} parent=11 // pred_check_branch
        %164 = sbr.rel (%p162) target = $region16
      $region15: #{inconv_forward.1} parent=11 // pred_region
        _
      $region16: #{inconv_forward.1} parent=11 // pred_fallthru
        _
      // Predicated region
      $region17: #{inconv_forward.1} parent=11 // pred_check
        %p165 = pneg %p79
      $region18: #{inconv_forward.1} parent=11 // pred_check_branch
        %167 = sbr.rel (%p165) target = $region20
      $region19: #{inconv_forward.1} parent=11 // pred_region
        _
      $region20: #{inconv_forward.1} parent=11 // pred_fallthru
        _
      // Predicated region
      $region21: #{inconv_forward.1} parent=11 // pred_check
        %p168 = pneg %p100
      $region22: #{inconv_forward.1} parent=11 // pred_check_branch
        %170 = sbr.rel (%p168) target = $region24
      $region23: #{inconv_forward.1} parent=11 // pred_region
        _
      $region24: #{inconv_forward.1} parent=11 // pred_fallthru
        _
      // Predicated region
      $region25: #{inconv_forward.1} parent=11 // pred_check
        %p171 = pneg %p121
      $region26: #{inconv_forward.1} parent=11 // pred_check_branch
        %173 = sbr.rel (%p171) target = $region28
      $region27: #{inconv_forward.1} parent=11 // pred_region
        _
      $region28: #{inconv_forward.1} parent=11 // pred_fallthru
        _
    $region12: #{inconv_forward.1} parent=5 // pred_fallthru
      _
    %p174 = scmp.lt.s32.totalorder %s11, 2
    // Predicated region
    $region29: #{inconv_forward.1} parent=5 // pred_check
      %p175 = pneg %p174
    $region30: #{inconv_forward.1} parent=5 // pred_check_branch
      %177 = sbr.rel (%p175) target = $region32
    $region31: #{inconv_forward.1} parent=5 // pred_region
      // Predicated region
      $region33: #{inconv_forward.1} parent=31 // pred_check
        %p178 = pneg %p31
      $region34: #{inconv_forward.1} parent=31 // pred_check_branch
        %180 = sbr.rel (%p178) target = $region36
      $region35: #{inconv_forward.1} parent=31 // pred_region
        %p181 = scmp.lt.s32.totalorder %s11, 1
        %s182 = scalar_select %p181, %s11, 1
        %s183 = smul.addr %s182, 2
        %s184 = smul.addr %s183, 4
        %s185 = scalar_lea.vmem %s0, %s184
      $region36: #{inconv_forward.1} parent=31 // pred_fallthru
        _
    $region32: #{inconv_forward.1} parent=5 // pred_fallthru
      _
    %p186 = scmp.le.s32.totalorder 1, %s11
    %p187 = scmp.lt.s32.totalorder %s11, 3
    %p188 = pnand %p186, %p187
    %p189 = pneg %p188
    // Predicated region
    $region37: #{inconv_forward.1} parent=5 // pred_check
      _
    $region38: #{inconv_forward.1} parent=5 // pred_check_branch
      %191 = sbr.rel (%p188) target = $region40
    $region39: #{inconv_forward.1} parent=5 // pred_region
      %s192 = ssub.s32 %s11, 1
      %p193 = scmp.lt.s32.totalorder %s16, 1
      %s194 = scalar_select %p193, %s16, 1
      %s195 = smul.addr %s194, 2
      %s196 = smul.addr %s195, 4
      %s197 = scalar_lea.vmem %s0, %s196
      %p198 = pneg %p37
      %p199 = pneg %p34
      %p200 = pneg %p58
      %p201 = pneg %p55
      %p202 = pneg %p79
      %p203 = pneg %p76
      %p204 = pneg %p100
      %p205 = pneg %p97
      %p206 = pneg %p121
      %p207 = pneg %p118
      %p208 = pneg %p147
      %p209 = pneg %p144
      %p210 = scmp.lt.s32.totalorder %s16, 1
      %s211 = scalar_select %p210, %s16, 1
      %s212 = smul.addr %s211, 2
      %s213 = smul.addr %s212, 4
      %s214 = scalar_lea.vmem %s5, %s213
      %p215 = scmp.lt.s32.totalorder %s16, 1
      %s216 = scalar_select %p215, %s16, 1
      %s217 = smul.addr %s216, 2
      %s218 = smul.addr %s217, 4
      %s219 = scalar_lea.vmem %s0, %s218
      %p220 = scmp.lt.s32.totalorder %s16, 1
      %s221 = scalar_select %p220, %s16, 1
      %s222 = smul.addr %s221, 2
      %s223 = smul.addr %s222, 4
      %s224 = scalar_lea.vmem %s5, %s223
      %vm226 = vcmask 516096
      %vm227 = vsmask.f32 256
      %vm228 = vmand %vm226, %vm227
      %v229 = vld [vmem:[#allocation2] sm:$0x1]
      %v230 = vsel %vm228, 0, %v229
      %231 = vst [vmem:[#allocation2] sm:$0x1] %v230
      %vm232 = vsmask.f32 7938
      %vm233 = vmand %vm226, %vm232
      %v234 = vld [vmem:[#allocation2 + $0x8] sm:$0x1]
      %v235 = vsel %vm233, 0, %v234
      %236 = vst [vmem:[#allocation2 + $0x8] sm:$0x1] %v235
      %vm237 = vcmask 1040384
      %vm238 = vmand %vm237, %vm227
      %v239 = vld [vmem:[#allocation3] sm:$0x1]
      %v240 = vsel %vm238, 0, %v239
      %241 = vst [vmem:[#allocation3] sm:$0x1] %v240
      %vm242 = vmand %vm237, %vm232
      %v243 = vld [vmem:[#allocation3 + $0x8] sm:$0x1]
      %v244 = vsel %vm242, 0, %v243
      %245 = vst [vmem:[#allocation3 + $0x8] sm:$0x1] %v244
      %v246 = vld [vmem:[%s219] sm:$0xf]
      %v247 = vld [vmem:[%s219 + $0x4] sm:$0xf]
      %vm248 = vsmask.f32 4368
      %vm249 = vmor %vm227, %vm248
      %v251 = vshrl.u32 %v246, 16
      %v253 = vrot.slane %v251, 7
      %v254 = vshll.u32 %v246, 16
      %v256 = vor.u32 %v253, %v254
      %v257 = vrot.slane %v253, 4
      %v259 = vshrl.u32 %v247, 16
      %v261 = vrot.slane %v259, 7
      %v262 = vshll.u32 %v247, 16
      %v264 = vor.u32 %v261, %v262
      %v265 = vsel %vm249, %v257, %v264
      %v266 = vrot.slane %v261, 4
      %vm270 = vcmask 519168
      %vm271 = vmand %vm270, %vm232
      %v272 = vld [vmem:[#allocation2] sm:$0xf]
      %v273 = vsel %vm271, %v256, %v272
      %274 = vst [vmem:[#allocation2] sm:$0xf] %v273
      %vm275 = vcmask 519168
      %276 = vst.msk [vmem:[#allocation2 + $0x4] sm:$0xf] %vm275, %v265
      %v277 = vld [vmem:[#allocation2 + $0x8] sm:$0x1]
      %v278 = vsel %vm228, %v266, %v277
      %279 = vst [vmem:[#allocation2 + $0x8] sm:$0x1] %v278
      %v280 = vld [vmem:[#allocation2] sm:$0xf]
      %v281 = vld [vmem:[#allocation2 + $0x4] sm:$0xf]
      %v282 = vld [vmem:[#allocation2 + $0x8] sm:$0x1]
      %v283 = vld [vmem:[%s1] sm:$0xf]
      %v284 = vld [vmem:[%s1 + $0x4] sm:$0xf]
      %v285 = vld [vmem:[%s1 + $0x8] sm:$0xf]
      %v286 = vld [vmem:[%s1 + $0xc] sm:$0xf]
      %v287 = vld [vmem:[%s1 + $0x10] sm:$0xf]
      %v288 = vld [vmem:[%s1 + $0x14] sm:$0xf]
      %v289 = vld [vmem:[%s1 + $0x18] sm:$0xf]
      %v290 = vld [vmem:[%s1 + $0x1c] sm:$0xf]
      %s291 = scalar_lea.vmem %s1, 32
      %v292 = vld [vmem:[%s291] sm:$0xf]
      %v293 = vld [vmem:[%s291 + $0x4] sm:$0xf]
      %v294 = vld [vmem:[%s291 + $0x8] sm:$0xf]
      %v295 = vld [vmem:[%s291 + $0xc] sm:$0xf]
      %v296 = vld [vmem:[%s291 + $0x10] sm:$0xf]
      %v297 = vld [vmem:[%s291 + $0x14] sm:$0xf]
      %v298 = vld [vmem:[%s291 + $0x18] sm:$0xf]
      %v299 = vld [vmem:[%s291 + $0x1c] sm:$0xf]
      %v303 = vunpack.c.l.b16 %v280
      %v304 = vunpack.c.l.b16 %v281
      %v305 = vunpack.c.l.b16 %v282
      %v306 = vpack.c.b16 %v304, %v303
      %v307 = vpack.c.b16 %v305, %v305
      %vm308 = vsmask.f32 7424
      %v310 = vshrl.u32 %v306, 16
      %v312 = vshll.u32 %v306, 16
      %v314 = vrot.slane %v312, 1
      %v315 = vor.u32 %v310, %v314
      %v317 = vshll.u32 %v307, 16
      %v319 = vrot.slane %v317, 1
      %v320 = vsel %vm308, %v315, %v319
      %v329 = vunpack.c.l.b16 %v292
      %v330 = vunpack.c.l.b16 %v293
      %v331 = vunpack.c.l.b16 %v294
      %v332 = vunpack.c.l.b16 %v295
      %v333 = vunpack.c.l.b16 %v296
      %v334 = vunpack.c.l.b16 %v297
      %v335 = vunpack.c.l.b16 %v298
      %v336 = vunpack.c.l.b16 %v299
      %v337 = vpack.c.b16 %v330, %v329
      %v338 = vpack.c.b16 %v332, %v331
      %v339 = vpack.c.b16 %v334, %v333
      %v340 = vpack.c.b16 %v336, %v335
      %vm345 = vcmask 523264
      %v347 = vsel %vm345, %v320, 0
      %349 = vmatpush.bf16.msra.mxu0 0
      %350 = vmatpush.bf16.msra.mxu0 0
      %351 = vmatpush.bf16.msra.mxu0 0
      %352 = vmatpush.bf16.msra.mxu0 0
      %353 = vmatpush.bf16.msra.mxu0 %v340
      %354 = vmatpush.bf16.msra.mxu0 %v339
      %355 = vmatpush.bf16.msra.mxu0 %v338
      %356 = vmatpush.bf16.msra.mxu0 %v337
      %357 = vmatmul.bf16.gmra.mxu0 %v347
      %v358 = vpop.f32.mrf.mxu0
      %v359 = vadd.f32 0.0, %v358
      %v360 = vpop.f32.mrf.mxu0
      %v361 = vadd.f32 0.0, %v360
      %362 = vdwg.mxu0
      %v371 = vunpack.c.l.b16 %v283
      %v372 = vunpack.c.l.b16 %v284
      %v373 = vunpack.c.l.b16 %v285
      %v374 = vunpack.c.l.b16 %v286
      %v375 = vunpack.c.l.b16 %v287
      %v376 = vunpack.c.l.b16 %v288
      %v377 = vunpack.c.l.b16 %v289
      %v378 = vunpack.c.l.b16 %v290
      %v379 = vpack.c.b16 %v372, %v371
      %v380 = vpack.c.b16 %v374, %v373
      %v381 = vpack.c.b16 %v376, %v375
      %v382 = vpack.c.b16 %v378, %v377
      %v387 = vsel %vm345, %v306, 0
      %389 = vmatpush.bf16.msra.mxu0 0
      %390 = vmatpush.bf16.msra.mxu0 0
      %391 = vmatpush.bf16.msra.mxu0 0
      %392 = vmatpush.bf16.msra.mxu0 0
      %393 = vmatpush.bf16.msra.mxu0 %v382
      %394 = vmatpush.bf16.msra.mxu0 %v381
      %395 = vmatpush.bf16.msra.mxu0 %v380
      %396 = vmatpush.bf16.msra.mxu0 %v379
      %397 = vmatmul.bf16.gmra.mxu0 %v387
      %v398 = vpop.f32.mrf.mxu0
      %v399 = vadd.f32 %v359, %v398
      %v400 = vpop.f32.mrf.mxu0
      %v401 = vadd.f32 %v361, %v400
      %402 = vdwg.mxu0
      %s403 = scalar_lea.vmem %s1, 64
      %v404 = vld [vmem:[%s403] sm:$0xf]
      %v405 = vld [vmem:[%s403 + $0x4] sm:$0xf]
      %v406 = vld [vmem:[%s403 + $0x8] sm:$0xf]
      %v407 = vld [vmem:[%s403 + $0xc] sm:$0xf]
      %v408 = vld [vmem:[%s403 + $0x10] sm:$0xf]
      %v409 = vld [vmem:[%s403 + $0x14] sm:$0xf]
      %v410 = vld [vmem:[%s403 + $0x18] sm:$0xf]
      %v411 = vld [vmem:[%s403 + $0x1c] sm:$0xf]
      %vm412 = vcmask 1046528
      %v413 = vrot.slane %v306, 1
      %v414 = vrot.slane %v307, 1
      %v415 = vsel %vm412, %v413, %v414
      %v424 = vunpack.c.l.b16 %v404
      %v425 = vunpack.c.l.b16 %v405
      %v426 = vunpack.c.l.b16 %v406
      %v427 = vunpack.c.l.b16 %v407
      %v428 = vunpack.c.l.b16 %v408
      %v429 = vunpack.c.l.b16 %v409
      %v430 = vunpack.c.l.b16 %v410
      %v431 = vunpack.c.l.b16 %v411
      %v432 = vpack.c.b16 %v425, %v424
      %v433 = vpack.c.b16 %v427, %v426
      %v434 = vpack.c.b16 %v429, %v428
      %v435 = vpack.c.b16 %v431, %v430
      %v441 = vsel %vm345, %v415, 0
      %443 = vmatpush.bf16.msra.mxu0 0
      %444 = vmatpush.bf16.msra.mxu0 0
      %445 = vmatpush.bf16.msra.mxu0 0
      %446 = vmatpush.bf16.msra.mxu0 0
      %447 = vmatpush.bf16.msra.mxu0 %v435
      %448 = vmatpush.bf16.msra.mxu0 %v434
      %449 = vmatpush.bf16.msra.mxu0 %v433
      %450 = vmatpush.bf16.msra.mxu0 %v432
      %451 = vmatmul.bf16.gmra.mxu0 %v441
      %v452 = vpop.f32.mrf.mxu0
      %v453 = vadd.f32 0.0, %v452
      %v454 = vpop.f32.mrf.mxu0
      %v455 = vadd.f32 0.0, %v454
      %456 = vdwg.mxu0
      %v457 = vadd.f32 %v399, %v453
      %v458 = vadd.f32 %v401, %v455
      %v459 = vld [vmem:[%s2] sm:$0x1]
      %v461 = vperm.slane %v459, 0
      %v463 = vadd.f32 %v457, %v461
      %v464 = vadd.f32 %v458, %v461
      %v465 = vmax.f32 %v463, 0.0
      %v466 = vmax.f32 %v464, 0.0
      %v467 = vpack.c.bf16 %v465, %v465
      %v468 = vpack.c.bf16 %v466, %v466
      %v470 = vshrl.u32 %v467, 16
      %v472 = vrot.slane %v470, 7
      %v473 = vshll.u32 %v467, 16
      %v475 = vor.u32 %v472, %v473
      %v476 = vrot.slane %v472, 4
      %v478 = vshrl.u32 %v468, 16
      %v480 = vrot.slane %v478, 7
      %v481 = vshll.u32 %v468, 16
      %v483 = vor.u32 %v480, %v481
      %v484 = vsel %vm249, %v476, %v483
      %v485 = vrot.slane %v480, 4
      %vm489 = vcmask 1043456
      %vm490 = vmand %vm489, %vm232
      %v491 = vld [vmem:[#allocation3] sm:$0xf]
      %v492 = vsel %vm490, %v475, %v491
      %493 = vst [vmem:[#allocation3] sm:$0xf] %v492
      %494 = vst [vmem:[#allocation3 + $0x4] sm:$0xf] %v484
      %v495 = vld [vmem:[#allocation3 + $0x8] sm:$0x1]
      %v496 = vsel %vm238, %v485, %v495
      %497 = vst [vmem:[#allocation3 + $0x8] sm:$0x1] %v496
      %v498 = vld [vmem:[#allocation3] sm:$0xf]
      %v499 = vld [vmem:[#allocation3 + $0x4] sm:$0xf]
      %v500 = vld [vmem:[#allocation3 + $0x8] sm:$0x1]
      %v501 = vld [vmem:[%s3] sm:$0xf]
      %v502 = vld [vmem:[%s3 + $0x4] sm:$0xf]
      %v503 = vld [vmem:[%s3 + $0x8] sm:$0xf]
      %v504 = vld [vmem:[%s3 + $0xc] sm:$0xf]
      %v505 = vld [vmem:[%s3 + $0x10] sm:$0xf]
      %v506 = vld [vmem:[%s3 + $0x14] sm:$0xf]
      %v507 = vld [vmem:[%s3 + $0x18] sm:$0xf]
      %v508 = vld [vmem:[%s3 + $0x1c] sm:$0xf]
      %v509 = vld [vmem:[%s3 + $0x20] sm:$0xf]
      %v510 = vld [vmem:[%s3 + $0x24] sm:$0xf]
      %v511 = vld [vmem:[%s3 + $0x28] sm:$0xf]
      %v512 = vld [vmem:[%s3 + $0x2c] sm:$0xf]
      %v513 = vld [vmem:[%s3 + $0x30] sm:$0xf]
      %v514 = vld [vmem:[%s3 + $0x34] sm:$0xf]
      %v515 = vld [vmem:[%s3 + $0x38] sm:$0xf]
      %v516 = vld [vmem:[%s3 + $0x3c] sm:$0xf]
      %s517 = scalar_lea.vmem %s3, 64
      %v518 = vld [vmem:[%s517] sm:$0xf]
      %v519 = vld [vmem:[%s517 + $0x4] sm:$0xf]
      %v520 = vld [vmem:[%s517 + $0x8] sm:$0xf]
      %v521 = vld [vmem:[%s517 + $0xc] sm:$0xf]
      %v522 = vld [vmem:[%s517 + $0x10] sm:$0xf]
      %v523 = vld [vmem:[%s517 + $0x14] sm:$0xf]
      %v524 = vld [vmem:[%s517 + $0x18] sm:$0xf]
      %v525 = vld [vmem:[%s517 + $0x1c] sm:$0xf]
      %v526 = vld [vmem:[%s517 + $0x20] sm:$0xf]
      %v527 = vld [vmem:[%s517 + $0x24] sm:$0xf]
      %v528 = vld [vmem:[%s517 + $0x28] sm:$0xf]
      %v529 = vld [vmem:[%s517 + $0x2c] sm:$0xf]
      %v530 = vld [vmem:[%s517 + $0x30] sm:$0xf]
      %v531 = vld [vmem:[%s517 + $0x34] sm:$0xf]
      %v532 = vld [vmem:[%s517 + $0x38] sm:$0xf]
      %v533 = vld [vmem:[%s517 + $0x3c] sm:$0xf]
      %v537 = vunpack.c.l.b16 %v498
      %v538 = vunpack.c.l.b16 %v499
      %v539 = vunpack.c.l.b16 %v500
      %v540 = vpack.c.b16 %v538, %v537
      %v541 = vpack.c.b16 %v539, %v539
      %v543 = vshrl.u32 %v540, 16
      %v545 = vshll.u32 %v540, 16
      %v547 = vrot.slane %v545, 1
      %v548 = vor.u32 %v543, %v547
      %v550 = vshll.u32 %v541, 16
      %v552 = vrot.slane %v550, 1
      %v553 = vsel %vm308, %v548, %v552
      %v571 = vunpack.c.l.b16 %v518
      %v572 = vunpack.c.l.b16 %v519
      %v573 = vunpack.c.l.b16 %v520
      %v574 = vunpack.c.l.b16 %v521
      %v575 = vunpack.c.l.b16 %v522
      %v576 = vunpack.c.l.b16 %v523
      %v577 = vunpack.c.l.b16 %v524
      %v578 = vunpack.c.l.b16 %v525
      %v579 = vunpack.c.l.b16 %v526
      %v580 = vunpack.c.l.b16 %v527
      %v581 = vunpack.c.l.b16 %v528
      %v582 = vunpack.c.l.b16 %v529
      %v583 = vunpack.c.l.b16 %v530
      %v584 = vunpack.c.l.b16 %v531
      %v585 = vunpack.c.l.b16 %v532
      %v586 = vunpack.c.l.b16 %v533
      %v587 = vpack.c.b16 %v572, %v571
      %v588 = vpack.c.b16 %v574, %v573
      %v589 = vpack.c.b16 %v576, %v575
      %v590 = vpack.c.b16 %v578, %v577
      %v591 = vpack.c.b16 %v580, %v579
      %v592 = vpack.c.b16 %v582, %v581
      %v593 = vpack.c.b16 %v584, %v583
      %v594 = vpack.c.b16 %v586, %v585
      %603 = vmatpush.bf16.msra.mxu0 %v594
      %604 = vmatpush.bf16.msra.mxu0 %v593
      %605 = vmatpush.bf16.msra.mxu0 %v592
      %606 = vmatpush.bf16.msra.mxu0 %v591
      %607 = vmatpush.bf16.msra.mxu0 %v590
      %608 = vmatpush.bf16.msra.mxu0 %v589
      %609 = vmatpush.bf16.msra.mxu0 %v588
      %610 = vmatpush.bf16.msra.mxu0 %v587
      %611 = vmatmul.bf16.gmra.mxu0 %v553
      %v612 = vpop.f32.mrf.mxu0
      %v613 = vadd.f32 0.0, %v612
      %v614 = vpop.f32.mrf.mxu0
      %v615 = vadd.f32 0.0, %v614
      %616 = vdwg.mxu0
      %v634 = vunpack.c.l.b16 %v501
      %v635 = vunpack.c.l.b16 %v502
      %v636 = vunpack.c.l.b16 %v503
      %v637 = vunpack.c.l.b16 %v504
      %v638 = vunpack.c.l.b16 %v505
      %v639 = vunpack.c.l.b16 %v506
      %v640 = vunpack.c.l.b16 %v507
      %v641 = vunpack.c.l.b16 %v508
      %v642 = vunpack.c.l.b16 %v509
      %v643 = vunpack.c.l.b16 %v510
      %v644 = vunpack.c.l.b16 %v511
      %v645 = vunpack.c.l.b16 %v512
      %v646 = vunpack.c.l.b16 %v513
      %v647 = vunpack.c.l.b16 %v514
      %v648 = vunpack.c.l.b16 %v515
      %v649 = vunpack.c.l.b16 %v516
      %v650 = vpack.c.b16 %v635, %v634
      %v651 = vpack.c.b16 %v637, %v636
      %v652 = vpack.c.b16 %v639, %v638
      %v653 = vpack.c.b16 %v641, %v640
      %v654 = vpack.c.b16 %v643, %v642
      %v655 = vpack.c.b16 %v645, %v644
      %v656 = vpack.c.b16 %v647, %v646
      %v657 = vpack.c.b16 %v649, %v648
      %666 = vmatpush.bf16.msra.mxu0 %v657
      %667 = vmatpush.bf16.msra.mxu0 %v656
      %668 = vmatpush.bf16.msra.mxu0 %v655
      %669 = vmatpush.bf16.msra.mxu0 %v654
      %670 = vmatpush.bf16.msra.mxu0 %v653
      %671 = vmatpush.bf16.msra.mxu0 %v652
      %672 = vmatpush.bf16.msra.mxu0 %v651
      %673 = vmatpush.bf16.msra.mxu0 %v650
      %674 = vmatmul.bf16.gmra.mxu0 %v540
      %v675 = vpop.f32.mrf.mxu0
      %v676 = vadd.f32 %v613, %v675
      %v677 = vpop.f32.mrf.mxu0
      %v678 = vadd.f32 %v615, %v677
      %679 = vdwg.mxu0
      %s680 = scalar_lea.vmem %s3, 128
      %v681 = vld [vmem:[%s680] sm:$0xf]
      %v682 = vld [vmem:[%s680 + $0x4] sm:$0xf]
      %v683 = vld [vmem:[%s680 + $0x8] sm:$0xf]
      %v684 = vld [vmem:[%s680 + $0xc] sm:$0xf]
      %v685 = vld [vmem:[%s680 + $0x10] sm:$0xf]
      %v686 = vld [vmem:[%s680 + $0x14] sm:$0xf]
      %v687 = vld [vmem:[%s680 + $0x18] sm:$0xf]
      %v688 = vld [vmem:[%s680 + $0x1c] sm:$0xf]
      %v689 = vld [vmem:[%s680 + $0x20] sm:$0xf]
      %v690 = vld [vmem:[%s680 + $0x24] sm:$0xf]
      %v691 = vld [vmem:[%s680 + $0x28] sm:$0xf]
      %v692 = vld [vmem:[%s680 + $0x2c] sm:$0xf]
      %v693 = vld [vmem:[%s680 + $0x30] sm:$0xf]
      %v694 = vld [vmem:[%s680 + $0x34] sm:$0xf]
      %v695 = vld [vmem:[%s680 + $0x38] sm:$0xf]
      %v696 = vld [vmem:[%s680 + $0x3c] sm:$0xf]
      %v697 = vrot.slane %v540, 1
      %v698 = vrot.slane %v541, 1
      %v699 = vsel %vm412, %v697, %v698
      %v717 = vunpack.c.l.b16 %v681
      %v718 = vunpack.c.l.b16 %v682
      %v719 = vunpack.c.l.b16 %v683
      %v720 = vunpack.c.l.b16 %v684
      %v721 = vunpack.c.l.b16 %v685
      %v722 = vunpack.c.l.b16 %v686
      %v723 = vunpack.c.l.b16 %v687
      %v724 = vunpack.c.l.b16 %v688
      %v725 = vunpack.c.l.b16 %v689
      %v726 = vunpack.c.l.b16 %v690
      %v727 = vunpack.c.l.b16 %v691
      %v728 = vunpack.c.l.b16 %v692
      %v729 = vunpack.c.l.b16 %v693
      %v730 = vunpack.c.l.b16 %v694
      %v731 = vunpack.c.l.b16 %v695
      %v732 = vunpack.c.l.b16 %v696
      %v733 = vpack.c.b16 %v718, %v717
      %v734 = vpack.c.b16 %v720, %v719
      %v735 = vpack.c.b16 %v722, %v721
      %v736 = vpack.c.b16 %v724, %v723
      %v737 = vpack.c.b16 %v726, %v725
      %v738 = vpack.c.b16 %v728, %v727
      %v739 = vpack.c.b16 %v730, %v729
      %v740 = vpack.c.b16 %v732, %v731
      %749 = vmatpush.bf16.msra.mxu0 %v740
      %750 = vmatpush.bf16.msra.mxu0 %v739
      %751 = vmatpush.bf16.msra.mxu0 %v738
      %752 = vmatpush.bf16.msra.mxu0 %v737
      %753 = vmatpush.bf16.msra.mxu0 %v736
      %754 = vmatpush.bf16.msra.mxu0 %v735
      %755 = vmatpush.bf16.msra.mxu0 %v734
      %756 = vmatpush.bf16.msra.mxu0 %v733
      %757 = vmatmul.bf16.gmra.mxu0 %v699
      %v758 = vpop.f32.mrf.mxu0
      %v759 = vadd.f32 0.0, %v758
      %v760 = vpop.f32.mrf.mxu0
      %v761 = vadd.f32 0.0, %v760
      %762 = vdwg.mxu0
      %v763 = vadd.f32 %v676, %v759
      %v764 = vadd.f32 %v678, %v761
      %v765 = vld [vmem:[%s4] sm:$0x1]
      %v767 = vperm.slane %v765, 0
      %v769 = vadd.f32 %v763, %v767
      %v770 = vadd.f32 %v764, %v767
      %v771 = vmax.f32 %v769, 0.0
      %v772 = vmax.f32 %v770, 0.0
      %v773 = vpack.c.bf16 %v771, %v771
      %v774 = vpack.c.bf16 %v772, %v772
      %775 = vst [vmem:[%s224] sm:$0xf] %v773
      %776 = vst [vmem:[%s224 + $0x4] sm:$0xf] %v774
      %p777 = scmp.lt.s32.totalorder %s16, 1
      %s778 = scalar_select %p777, %s16, 1
      %s779 = smul.addr %s778, 2
      %s780 = smul.addr %s779, 4
      %s781 = scalar_lea.vmem %s5, %s780
      // Predicated region
      $region41: #{inconv_forward.1} parent=39 // pred_check
        %p782 = pneg %p144
      $region42: #{inconv_forward.1} parent=39 // pred_check_branch
        %784 = sbr.rel (%p782) target = $region44
      $region43: #{inconv_forward.1} parent=39 // pred_region
        _
      $region44: #{inconv_forward.1} parent=39 // pred_fallthru
        _
    $region40: #{inconv_forward.1} parent=5 // pred_fallthru
      _
    %p785 = scmp.le.s32.totalorder 2, %s11
    // Predicated region
    $region45: #{inconv_forward.1} parent=5 // pred_check
      %p786 = pneg %p785
    $region46: #{inconv_forward.1} parent=5 // pred_check_branch
      %788 = sbr.rel (%p786) target = $region48
    $region47: #{inconv_forward.1} parent=5 // pred_region
      %s789 = ssub.s32 %s11, 2
      // Predicated region
      $region49: #{inconv_forward.1} parent=47 // pred_check
        %p790 = pneg %p150
      $region50: #{inconv_forward.1} parent=47 // pred_check_branch
        %792 = sbr.rel (%p790) target = $region52
      $region51: #{inconv_forward.1} parent=47 // pred_region
        %p793 = scmp.lt.s32.totalorder %s17, 1
        %s794 = scalar_select %p793, %s17, 1
        %s795 = smul.addr %s794, 2
        %s796 = smul.addr %s795, 4
        %s797 = scalar_lea.vmem %s5, %s796
      $region52: #{inconv_forward.1} parent=47 // pred_fallthru
        _
    $region48: #{inconv_forward.1} parent=5 // pred_fallthru
      _
  $region6: #{inconv_forward.1} parent=0 // loop_footer
    %s15 = sadd.s32 1, %s11
  $region7: #{inconv_forward.1} parent=0 // loop_footer_branch
    %10 = sbr.rel target = $region3
  $region8: #{inconv_forward.1} parent=0 // loop_exit
    _

</llo_original>
